<compile_context>
chip_gen: v6e
topology: v6e:2x2x1
jax: 0.10.0
libtpu: 0.0.40
codegen_flags: <defaults>
</compile_context>

<pallas_src>
import functools

import jax
import jax.numpy as jnp
from jax import lax
from jax.experimental import pallas as pl
from jax.experimental.pallas import tpu as pltpu


def _pick_tile(dim, pref):
    """Largest tile <= pref dividing dim, preferring lane/MXU aligned (x128)."""
    if dim <= pref:
        return dim
    for t in range(pref, 127, -1):
        if dim % t == 0 and t % 128 == 0:
            return t
    for t in range(pref, 0, -1):
        if dim % t == 0:
            return t
    return dim


# ----------------------------------------------------------------------------
# Pallas kernel 1: tiled dense matmul  out = x @ w_t   (weights pre-transposed)
# bf16 operands, f32 accumulation in VMEM scratch, flush on last K step.
# ----------------------------------------------------------------------------
def _linear_kernel(x_ref, w_ref, o_ref, acc_ref):
    @pl.when(pl.program_id(2) == 0)
    def _():
        acc_ref[...] = jnp.zeros_like(acc_ref)

    acc_ref[...] += jnp.dot(
        x_ref[...], w_ref[...], preferred_element_type=jnp.float32
    )

    @pl.when(pl.program_id(2) == pl.num_programs(2) - 1)
    def _():
        o_ref[...] = acc_ref[...].astype(o_ref.dtype)


def pallas_linear(x2d, w_t, out_dtype=None, tm=256, tn=256, tk=512):
    M, K = x2d.shape
    K2, N = w_t.shape
    assert K == K2
    out_dtype = out_dtype if out_dtype is not None else x2d.dtype
    tm = _pick_tile(M, tm)
    tn = _pick_tile(N, tn)
    tk = _pick_tile(K, tk)
    grid = (M // tm, N // tn, K // tk)
    bytes_acc = int(
        M * K * x2d.dtype.itemsize
        + K * N * w_t.dtype.itemsize
        + M * N * jnp.dtype(out_dtype).itemsize
    )
    return pl.pallas_call(
        _linear_kernel,
        out_shape=jax.ShapeDtypeStruct((M, N), out_dtype),
        grid_spec=pltpu.PrefetchScalarGridSpec(
            num_scalar_prefetch=0,
            grid=grid,
            in_specs=[
                pl.BlockSpec((tm, tk), lambda i, j, k: (i, k)),
                pl.BlockSpec((tk, tn), lambda i, j, k: (k, j)),
            ],
            out_specs=pl.BlockSpec((tm, tn), lambda i, j, k: (i, j)),
            scratch_shapes=[pltpu.VMEM((tm, tn), jnp.float32)],
        ),
        compiler_params=pltpu.CompilerParams(
            dimension_semantics=("parallel", "parallel", "arbitrary")
        ),
        cost_estimate=pl.CostEstimate(
            flops=2 * M * N * K, transcendentals=0, bytes_accessed=bytes_acc
        ),
    )(x2d, w_t)


# ----------------------------------------------------------------------------
# Pallas kernel 2: GQA-grouped flash attention core per (batch, kv_head)
# grid = (B, KVH, S // tkv); online softmax over the KV axis (VMEM-bounded).
# ----------------------------------------------------------------------------
def _attn_kernel(q_ref, k_ref, v_ref, m_ref, o_ref, m_sc, l_sc, acc_sc, *,
                 scaling, softcap, qpk):
    kv_i = pl.program_id(2)

    @pl.when(kv_i == 0)
    def _():
        m_sc[...] = jnp.full_like(m_sc, -jnp.inf)
        l_sc[...] = jnp.zeros_like(l_sc)
        acc_sc[...] = jnp.zeros_like(acc_sc)

    q = q_ref[0, 0]          # (qpk*T, D)   bf16
    k = k_ref[0, 0]          # (tkv,   D)   bf16
    v = v_ref[0, 0]          # (tkv,   D)   bf16
    mask = m_ref[0, 0]       # (T,   tkv)   f32

    # QK^T: contract D on both operands (no explicit k.T relayout), f32 acc.
    s = lax.dot_general(
        q, k, (((1,), (1,)), ((), ())), preferred_element_type=jnp.float32
    )                                                   # (qpk*T, tkv)
    s = s * scaling                                     # scale folded post-MXU (f32)
    if softcap is not None:
        s = jnp.tanh(s * (1.0 / softcap)) * softcap
    if qpk > 1:
        mask = jnp.concatenate([mask] * qpk, axis=0)    # (qpk*T, tkv)
    s = s + mask

    # Online (flash) softmax across KV blocks.
    m_prev = m_sc[...]
    m_new = jnp.maximum(m_prev, jnp.max(s, axis=-1, keepdims=True))
    alpha = jnp.exp(m_prev - m_new)
    p = jnp.exp(s - m_new)
    l_sc[...] = alpha * l_sc[...] + jnp.sum(p, axis=-1, keepdims=True)
    acc_sc[...] = alpha * acc_sc[...] + jnp.dot(
        p.astype(v.dtype), v, preferred_element_type=jnp.float32
    )
    m_sc[...] = m_new

    @pl.when(kv_i == pl.num_programs(2) - 1)
    def _():
        inv_l = pl.reciprocal(l_sc[...], approx=True)
        o_ref[0, 0] = (acc_sc[...] * inv_l).astype(o_ref.dtype)


def pallas_attention_core(q, k, v, mask, scaling, softcap, tkv_pref=512):
    B, H, T, D = q.shape
    _, KVH, S, _ = k.shape
    qpk = H // KVH
    # Pack the qpk query heads of each KV group into one (qpk*T, D) slab so the
    # MXU tiles are denser and K/V + mask DMA are amortized over the group.
    qg = q.astype(jnp.bfloat16).reshape(B, KVH, qpk * T, D)
    kb = k.astype(jnp.bfloat16)
    vb = v.astype(jnp.bfloat16)
    mask = mask.astype(jnp.float32)
    tkv = _pick_tile(S, tkv_pref)
    n_kv = S // tkv
    kern = functools.partial(
        _attn_kernel,
        scaling=float(scaling),
        softcap=None if softcap is None else float(softcap),
        qpk=qpk,
    )
    bytes_acc = int(2 * (qg.size + kb.size + vb.size + qg.size) + 4 * mask.size)
    out = pl.pallas_call(
        kern,
        out_shape=jax.ShapeDtypeStruct((B, KVH, qpk * T, D), jnp.bfloat16),
        grid_spec=pltpu.PrefetchScalarGridSpec(
            num_scalar_prefetch=0,
            grid=(B, KVH, n_kv),
            in_specs=[
                pl.BlockSpec((1, 1, qpk * T, D), lambda b, g, s: (b, g, 0, 0)),
                pl.BlockSpec((1, 1, tkv, D), lambda b, g, s: (b, g, s, 0)),
                pl.BlockSpec((1, 1, tkv, D), lambda b, g, s: (b, g, s, 0)),
                pl.BlockSpec((1, 1, T, tkv), lambda b, g, s: (b, 0, 0, s)),
            ],
            out_specs=pl.BlockSpec((1, 1, qpk * T, D), lambda b, g, s: (b, g, 0, 0)),
            scratch_shapes=[
                pltpu.VMEM((qpk * T, 1), jnp.float32),   # running max
                pltpu.VMEM((qpk * T, 1), jnp.float32),   # running denominator
                pltpu.VMEM((qpk * T, D), jnp.float32),   # running output accumulator
            ],
        ),
        compiler_params=pltpu.CompilerParams(
            dimension_semantics=("parallel", "parallel", "arbitrary")
        ),
        cost_estimate=pl.CostEstimate(
            flops=4 * B * H * T * S * D,
            transcendentals=2 * B * H * T * S,
            bytes_accessed=bytes_acc,
        ),
    )(qg, kb, vb, mask)
    return out.reshape(B, H, T, D)


# ----------------------------------------------------------------------------
# Glue ops (small elementwise / scatter) in plain JAX
# ----------------------------------------------------------------------------
def rms_norm(x, weight, eps):
    # Gemma RMSNorm: normalize in fp32, scale by (1 + weight).
    xf = x.astype(jnp.float32)
    var = jnp.mean(xf * xf, axis=-1, keepdims=True)
    xn = xf * jax.lax.rsqrt(var + eps)
    return (xn * (1.0 + weight.astype(jnp.float32))).astype(x.dtype)


def apply_rotary_emb(x, cos, sin):
    # x: (B, T, H, D); cos/sin: (T, D//2)   (real/imag parts of freqs_cis)
    D = x.shape[-1]
    x1, x2 = x[..., : D // 2], x[..., D // 2 :]
    c = cos[None, :, None, :]
    s = sin[None, :, None, :]
    out1 = x1 * c - x2 * s
    out2 = x1 * s + x2 * c
    return jnp.concatenate([out1, out2], axis=-1).astype(x.dtype)
    # TODO(synk): fuse RMSNorm+RoPE into the attention kernel (pltpu.roll on head_dim)
    # to avoid materializing (B,T,H,D) temporaries between pallas_calls.


# ----------------------------------------------------------------------------
# GemmaAttention (Pallas-backed)
# ----------------------------------------------------------------------------
class GemmaAttentionPallas:
    def __init__(
        self,
        key,
        hidden_size=32,
        num_heads=4,
        num_kv_heads=2,
        head_dim=16,
        query_pre_attn_scalar=None,
        attn_logit_softcapping=50.0,
        use_qk_norm=True,
        rms_norm_eps=1e-6,
        use_bias=False,
        attn_type="GLOBAL",
        sliding_window_size=None,
    ):
        assert num_heads % num_kv_heads == 0
        self.num_heads = num_heads
        self.num_kv_heads = num_kv_heads
        self.num_queries_per_kv = num_heads // num_kv_heads
        self.head_dim = head_dim
        self.hidden_size = hidden_size
        self.q_size = num_heads * head_dim
        self.kv_size = num_kv_heads * head_dim
        if query_pre_attn_scalar is not None:
            self.scaling = query_pre_attn_scalar ** (-0.5)
        else:
            self.scaling = head_dim ** (-0.5)
        self.attn_logit_softcapping = attn_logit_softcapping
        self.use_qk_norm = use_qk_norm
        self.rms_norm_eps = rms_norm_eps
        self.use_bias = use_bias
        self.attn_type = attn_type
        self.sliding_window_size = sliding_window_size

        # Deterministic parameter init (synthetic; no checkpoint load).
        k1, k2, k3, k4 = jax.random.split(key, 4)
        qkv_out = (num_heads + 2 * num_kv_heads) * head_dim
        # torch Linear weight is (out, in); store pre-transposed (in, out) in bf16
        # so the MXU runs at bf16 rate and weight DMA bytes are halved.
        self.w_qkv_t = (
            0.02 * jax.random.normal(k1, (hidden_size, qkv_out), jnp.float32)
        ).astype(jnp.bfloat16)
        self.w_o_t = (
            0.02 * jax.random.normal(k2, (self.q_size, hidden_size), jnp.float32)
        ).astype(jnp.bfloat16)
        if use_qk_norm:
            self.q_norm_w = 0.1 * jax.random.normal(k3, (head_dim,), jnp.float32)
            self.k_norm_w = 0.1 * jax.random.normal(k4, (head_dim,), jnp.float32)
        else:
            self.q_norm_w = None
            self.k_norm_w = None
        # TODO(synk): quantized Linear (config.quant / quant_type) not implemented;
        # plain bf16 weights are used.

    def __call__(
        self, hidden_states, cos, sin, kv_write_indices, kv_cache, mask, local_mask=None
    ):
        B, T, C = hidden_states.shape
        assert C == self.hidden_size

        # qkv projection (tiled Pallas matmul, bf16 operands, f32 accumulation)
        x2d = hidden_states.reshape(B * T, C).astype(jnp.bfloat16)
        qkv = pallas_linear(x2d, self.w_qkv_t, out_dtype=jnp.float32)
        qkv = qkv.reshape(B, T, -1)
        xq = qkv[..., : self.q_size].reshape(B, T, self.num_heads, self.head_dim)
        xk = qkv[..., self.q_size : self.q_size + self.kv_size].reshape(
            B, T, self.num_kv_heads, self.head_dim
        )
        xv = qkv[..., self.q_size + self.kv_size :].reshape(
            B, T, self.num_kv_heads, self.head_dim
        )

        if self.use_qk_norm:
            xq = rms_norm(xq, self.q_norm_w, self.rms_norm_eps)
            xk = rms_norm(xk, self.k_norm_w, self.rms_norm_eps)

        xq = apply_rotary_emb(xq, cos, sin)
        xk = apply_rotary_emb(xk, cos, sin)

        # KV cache write (torch index_copy_ along dim=1)
        # TODO(synk): in a real decode loop, donate / alias the cache buffers
        # (jax.jit donate_argnums or input_output_aliases) to avoid a full copy.
        k_cache, v_cache = kv_cache
        k_cache = k_cache.at[:, kv_write_indices, :, :].set(xk.astype(k_cache.dtype))
        v_cache = v_cache.at[:, kv_write_indices, :, :].set(xv.astype(v_cache.dtype))

        q = jnp.transpose(xq, (0, 2, 1, 3))        # (B, H,   T, D)
        k = jnp.transpose(k_cache, (0, 2, 1, 3))   # (B, KVH, S, D)
        v = jnp.transpose(v_cache, (0, 2, 1, 3))   # (B, KVH, S, D)

        if (
            self.attn_type == "LOCAL_SLIDING"
            and self.sliding_window_size is not None
            and local_mask is not None
        ):
            mask = local_mask

        out = pallas_attention_core(
            q, k, v, mask, self.scaling, self.attn_logit_softcapping
        )                                           # (B, H, T, D) bf16
        out = jnp.transpose(out, (0, 2, 1, 3)).reshape(B * T, self.q_size)
        out = pallas_linear(out, self.w_o_t, out_dtype=hidden_states.dtype)  # o_proj
        return out.reshape(B, T, self.hidden_size)


# ----------------------------------------------------------------------------
# Pure-JAX reference (same math, same bf16 boundaries, no Pallas).
# ----------------------------------------------------------------------------
def reference_forward(m, hidden_states, cos, sin, kv_write_indices, kv_cache, mask):
    B, T, C = hidden_states.shape
    f32 = jnp.float32
    x = hidden_states.astype(jnp.bfloat16).astype(f32).reshape(B * T, C)
    qkv = (x @ m.w_qkv_t.astype(f32)).reshape(B, T, -1)
    xq = qkv[..., : m.q_size].reshape(B, T, m.num_heads, m.head_dim)
    xk = qkv[..., m.q_size : m.q_size + m.kv_size].reshape(B, T, m.num_kv_heads, m.head_dim)
    xv = qkv[..., m.q_size + m.kv_size :].reshape(B, T, m.num_kv_heads, m.head_dim)
    if m.use_qk_norm:
        xq = rms_norm(xq, m.q_norm_w, m.rms_norm_eps)
        xk = rms_norm(xk, m.k_norm_w, m.rms_norm_eps)
    xq = apply_rotary_emb(xq, cos, sin)
    xk = apply_rotary_emb(xk, cos, sin)
    k_cache, v_cache = kv_cache
    k_cache = k_cache.at[:, kv_write_indices, :, :].set(xk.astype(k_cache.dtype))
    v_cache = v_cache.at[:, kv_write_indices, :, :].set(xv.astype(v_cache.dtype))
    key = jnp.repeat(k_cache, m.num_queries_per_kv, axis=2)
    val = jnp.repeat(v_cache, m.num_queries_per_kv, axis=2)
    q = jnp.transpose(xq, (0, 2, 1, 3)).astype(jnp.bfloat16).astype(f32) * m.scaling
    k = jnp.transpose(key, (0, 2, 1, 3)).astype(jnp.bfloat16).astype(f32)
    v = jnp.transpose(val, (0, 2, 1, 3)).astype(jnp.bfloat16).astype(f32)
    s = jnp.einsum("bhtd,bhsd->bhts", q, k)
    if m.attn_logit_softcapping is not None:
        s = jnp.tanh(s / m.attn_logit_softcapping) * m.attn_logit_softcapping
    s = s + mask.astype(f32)
    p = jax.nn.softmax(s, axis=-1)
    out = jnp.einsum("bhts,bhsd->bhtd", p, v)
    out = jnp.transpose(out, (0, 2, 1, 3)).reshape(B * T, m.q_size)
    out = out.astype(jnp.bfloat16).astype(f32)
    return (out @ m.w_o_t.astype(f32)).reshape(B, T, m.hidden_size).astype(
        hidden_states.dtype
    )


if __name__ == "__main__":
    key = jax.random.PRNGKey(0)
    k_params, k_x = jax.random.split(key, 2)

    # Small config
    B, T, S = 2, 8, 16           # batch, input_len, cache_len
    hidden, H, KVH, D = 32, 4, 2, 16

    module = GemmaAttentionPallas(
        k_params,
        hidden_size=hidden,
        num_heads=H,
        num_kv_heads=KVH,
        head_dim=D,
        attn_logit_softcapping=50.0,
        use_qk_norm=True,
        attn_type="GLOBAL",
    )

    hidden_states = jax.random.normal(k_x, (B, T, hidden), jnp.float32)

    # rotary frequencies (real cos/sin parts of freqs_cis) for positions 0..T-1
    theta = 10000.0
    inv_freq = 1.0 / (theta ** (jnp.arange(0, D, 2, dtype=jnp.float32) / D))
    pos = jnp.arange(T, dtype=jnp.float32)
    angles = jnp.outer(pos, inv_freq)            # (T, D/2)
    cos, sin = jnp.cos(angles), jnp.sin(angles)

    kv_write_indices = jnp.arange(T, dtype=jnp.int32)
    k_cache = jnp.zeros((B, S, KVH, D), jnp.bfloat16)
    v_cache = jnp.zeros((B, S, KVH, D), jnp.bfloat16)

    # causal mask over the cache: query i may attend to key positions j <= i
    q_pos = jnp.arange(T)[:, None]
    k_pos = jnp.arange(S)[None, :]
    mask = jnp.where(k_pos <= q_pos, 0.0, -2.3819763e38).astype(jnp.float32)
    mask = jnp.broadcast_to(mask[None, None], (B, 1, T, S))

    out = module(hidden_states, cos, sin, kv_write_indices, (k_cache, v_cache), mask)
    out = jax.block_until_ready(out)

    ref = reference_forward(
        module, hidden_states, cos, sin, kv_write_indices, (k_cache, v_cache), mask
    )
    assert out.shape == (B, T, hidden)
    assert jnp.allclose(out, ref, atol=5e-3, rtol=5e-2), (
        float(jnp.max(jnp.abs(out - ref)))
    )

    print("KERNEL_OK")
</pallas_src>

<mosaic_0001>
module attributes {stable_mosaic.version = 11 : i64} {
  func.func @_linear_kernel(%arg0: i32, %arg1: i32, %arg2: i32, %arg3: memref<16x32xbf16, #tpu.memory_space<vmem>>, %arg4: memref<32x128xbf16, #tpu.memory_space<vmem>>, %arg5: memref<16x128xf32, #tpu.memory_space<vmem>>, %arg6: memref<16x128xf32, #tpu.memory_space<vmem>>) attributes {dimension_semantics = [#tpu.dimension_semantics<parallel>, #tpu.dimension_semantics<parallel>, #tpu.dimension_semantics<arbitrary>], iteration_bounds = array<i64: 1, 1, 1>, scalar_prefetch = 0 : i64, scratch_operands = 1 : i64, tpu.core_type = #tpu.core_type<tc>, window_params = [{transform_indices = @transform_0, window_bounds = array<i64: 16, 32>}, {transform_indices = @transform_1, window_bounds = array<i64: 32, 128>}, {transform_indices = @transform_2, window_bounds = array<i64: 16, 128>}]} {
    %c0_i32 = arith.constant 0 : i32
    %0 = arith.cmpi eq, %arg2, %c0_i32 : i32
    %1 = arith.extui %0 : i1 to i32
    %c0_i32_0 = arith.constant 0 : i32
    %2 = arith.cmpi ne, %1, %c0_i32_0 : i32
    scf.if %2 {
      %cst_10 = arith.constant 0.000000e+00 : f32
      %12 = vector.broadcast %cst_10 : f32 to vector<16x128xf32>
      %c0_11 = arith.constant 0 : index
      %c0_12 = arith.constant 0 : index
      %13 = vector.load %arg6[%c0_11, %c0_12] : memref<16x128xf32, #tpu.memory_space<vmem>>, vector<16x128xf32>
      tpu.vector_store %arg6[%c0_11, %c0_12], %12 {strides = array<i32>} : memref<16x128xf32, #tpu.memory_space<vmem>>, vector<16x128xf32>,
    } else {
    }
    %c0 = arith.constant 0 : index
    %c0_1 = arith.constant 0 : index
    %3 = vector.load %arg6[%c0, %c0_1] : memref<16x128xf32, #tpu.memory_space<vmem>>, vector<16x128xf32>
    %c0_2 = arith.constant 0 : index
    %c0_3 = arith.constant 0 : index
    %4 = vector.load %arg3[%c0_2, %c0_3] : memref<16x32xbf16, #tpu.memory_space<vmem>>, vector<16x32xbf16>
    %c0_4 = arith.constant 0 : index
    %c0_5 = arith.constant 0 : index
    %5 = vector.load %arg4[%c0_4, %c0_5] : memref<32x128xbf16, #tpu.memory_space<vmem>>, vector<32x128xbf16>
    %cst = arith.constant dense<0.000000e+00> : vector<16x128xf32>
    %6 = tpu.matmul %4, %5, %cst {dimension_numbers = #tpu.dot_dimension_numbers<[1], [0], [0], [1], [0, 0, 1, 1], [], []>} : vector<16x32xbf16>, vector<32x128xbf16>, vector<16x128xf32> -> vector<16x128xf32>
    %7 = arith.addf %3, %6 : vector<16x128xf32>
    %c0_6 = arith.constant 0 : index
    %c0_7 = arith.constant 0 : index
    %8 = vector.load %arg6[%c0_6, %c0_7] : memref<16x128xf32, #tpu.memory_space<vmem>>, vector<16x128xf32>
    tpu.vector_store %arg6[%c0_6, %c0_7], %7 {strides = array<i32>} : memref<16x128xf32, #tpu.memory_space<vmem>>, vector<16x128xf32>,
    %c0_i32_8 = arith.constant 0 : i32
    %9 = arith.cmpi eq, %arg2, %c0_i32_8 : i32
    %10 = arith.extui %9 : i1 to i32
    %c0_i32_9 = arith.constant 0 : i32
    %11 = arith.cmpi ne, %10, %c0_i32_9 : i32
    scf.if %11 {
      %c0_10 = arith.constant 0 : index
      %c0_11 = arith.constant 0 : index
      %12 = vector.load %arg6[%c0_10, %c0_11] : memref<16x128xf32, #tpu.memory_space<vmem>>, vector<16x128xf32>
      %c0_12 = arith.constant 0 : index
      %c0_13 = arith.constant 0 : index
      %13 = vector.load %arg5[%c0_12, %c0_13] : memref<16x128xf32, #tpu.memory_space<vmem>>, vector<16x128xf32>
      tpu.vector_store %arg5[%c0_12, %c0_13], %12 {strides = array<i32>} : memref<16x128xf32, #tpu.memory_space<vmem>>, vector<16x128xf32>,
    } else {
    }
    return
  }
  func.func @transform_0(%arg0: i32, %arg1: i32, %arg2: i32) -> (i32, i32) {
    %c0_i32 = arith.constant 0 : i32
    return %arg0, %arg2 : i32, i32
  }
  func.func @transform_1(%arg0: i32, %arg1: i32, %arg2: i32) -> (i32, i32) {
    %c0_i32 = arith.constant 0 : i32
    return %arg2, %arg1 : i32, i32
  }
  func.func @transform_2(%arg0: i32, %arg1: i32, %arg2: i32) -> (i32, i32) {
    %c0_i32 = arith.constant 0 : i32
    return %arg0, %arg1 : i32, i32
  }
}

</mosaic_0001>

<llo_original>
// kernel: tpu_custom_call.1
$region0: #{tpu_custom_call.1}
  #allocation0 [shape = 'u32[]', space=smem, size = 0x4, offset = 0x4, fixed_abs, tag = 'smem constant byte address 0x4 - core index']
  #allocation1 [shape = 'u32[144,128]{1,0:T(1,128)}', space=vmem, size = 0x12000, scoped, tag = 'internal scratch']
  #allocation2 [shape = 'f32[16,128]{1,0:T(8,128)}', space=vmem, size = 0x2000, scoped, tag = 'scratch operand']
  %s0 = inlined_call_operand.hbm [shape: bf16[16,32], index: 0, kind: input, shape index: {}]
  %s1 = inlined_call_operand.hbm [shape: bf16[32,128], index: 1, kind: input, shape index: {}]
  %s2 = inlined_call_operand.hbm [shape: f32[16,128], index: 2, kind: output, shape index: {}]
  %s3 = sld [smem:[#allocation0]]
  $region34: #{tpu_custom_call.1} parent=0
    _
  %s5 = ssub.s32 1, %s3
  %s6 = scalar_select 0, %s5, %s3
  $region1: #{tpu_custom_call.1} parent=0
    #allocation3 [shape = 'u8[4096]{0}', space=vmem, size = 0x1000, scoped, tag = 'input window, operand 0, single buffered']
    #allocation4 [shape = 's32[1]{0}', space=sflag, size = 0x4, scoped, tag = 'scoped memory for tpu_custom_call.1']
    #allocation5 [shape = 's32[1]{0}', space=sflag, size = 0x4, scoped, tag = 'scoped memory for tpu_custom_call.1']
    #allocation6 [shape = 'u8[8192]{0}', space=vmem, size = 0x2000, scoped, tag = 'input window, operand 1, single buffered']
    #allocation7 [shape = 's32[1]{0}', space=sflag, size = 0x4, scoped, tag = 'scoped memory for tpu_custom_call.1']
    #allocation8 [shape = 'u8[8192]{0}', space=vmem, size = 0x2000, scoped, tag = 'output window, operand 0, single buffered']
    %7 = vsyncpa [#allocation4], 0
    %8 = vsyncpa [#allocation7], 0
    %9 = vsyncpa [#allocation5], 0
    // Predicated region
    $region2: #{tpu_custom_call.1} parent=1 // pred_check
      _
    $region3: #{tpu_custom_call.1} parent=1 // pred_check_branch
      %11 = sbr.rel (0) target = $region5
    $region4: #{tpu_custom_call.1} parent=1 // pred_region
      %s13 = ssub.s32 128, 128
      %14 = vsyncadd [#allocation4], %s13
      %s15 = sshll.u32 [#allocation3], 4
      %s16 = int_to_ptr.vmem [resolvable:$true] %s15
      %21 = dma.hbm_to_vmem [thread:$0]  %s0, 128, %s16, [#allocation4], 64, 64, 4
    $region5: #{tpu_custom_call.1} parent=1 // pred_fallthru
      _
    // Predicated region
    $region6: #{tpu_custom_call.1} parent=1 // pred_check
      _
    $region7: #{tpu_custom_call.1} parent=1 // pred_check_branch
      %23 = sbr.rel (0) target = $region9
    $region8: #{tpu_custom_call.1} parent=1 // pred_region
      %s25 = ssub.s32 256, 256
      %26 = vsyncadd [#allocation7], %s25
      %s27 = sshll.u32 [#allocation6], 4
      %s28 = int_to_ptr.vmem [resolvable:$true] %s27
      %33 = dma.hbm_to_vmem [thread:$0]  %s1, 256, %s28, [#allocation7], 64, 64, 4
    $region9: #{tpu_custom_call.1} parent=1 // pred_fallthru
      _
    // Predicated region
    $region10: #{tpu_custom_call.1} parent=1 // pred_check
      _
    $region11: #{tpu_custom_call.1} parent=1 // pred_check_branch
      %35 = sbr.rel (0) target = $region13
    $region12: #{tpu_custom_call.1} parent=1 // pred_region
      %36 = dma.done [#allocation4], 128
    $region13: #{tpu_custom_call.1} parent=1 // pred_fallthru
      _
    // Predicated region
    $region14: #{tpu_custom_call.1} parent=1 // pred_check
      _
    $region15: #{tpu_custom_call.1} parent=1 // pred_check_branch
      %38 = sbr.rel (0) target = $region17
    $region16: #{tpu_custom_call.1} parent=1 // pred_region
      %39 = dma.done [#allocation7], 256
    $region17: #{tpu_custom_call.1} parent=1 // pred_fallthru
      _
    %p41 = scmp.eq.s32.totalorder 0, 0
    // Predicated region
    $region18: #{tpu_custom_call.1} parent=1 // pred_check
      %p42 = pneg %p41
    $region19: #{tpu_custom_call.1} parent=1 // pred_check_branch
      %44 = sbr.rel (%p42) target = $region21
    $region20: #{tpu_custom_call.1} parent=1 // pred_region
      %45 = vst [vmem:[#allocation2] sm:$0xff] 0.0
      %46 = vst [vmem:[#allocation2 + $0x8] sm:$0xff] 0.0
    $region21: #{tpu_custom_call.1} parent=1 // pred_fallthru
      _
    %v47 = vld [vmem:[#allocation2] sm:$0xff]
    %v48 = vld [vmem:[#allocation2 + $0x8] sm:$0xff]
    %v49 = vld [vmem:[#allocation3] sm:$0xf]
    %v50 = vld [vmem:[#allocation3 + $0x4] sm:$0xf]
    %v51 = vld [vmem:[#allocation6] sm:$0xf]
    %v52 = vld [vmem:[#allocation6 + $0x4] sm:$0xf]
    %v53 = vld [vmem:[#allocation6 + $0x8] sm:$0xf]
    %v54 = vld [vmem:[#allocation6 + $0xc] sm:$0xf]
    %v57 = vunpack.c.l.b16 %v49
    %v58 = vunpack.c.l.b16 %v50
    %v59 = vpack.c.b16 %v58, %v57
    %v64 = vunpack.c.l.b16 %v51
    %v65 = vunpack.c.l.b16 %v52
    %v66 = vunpack.c.l.b16 %v53
    %v67 = vunpack.c.l.b16 %v54
    %v68 = vpack.c.b16 %v65, %v64
    %v69 = vpack.c.b16 %v67, %v66
    %vm72 = vcmask 261120
    %v74 = vsel %vm72, %v59, 0
    %76 = vmatprep.subr.bf16.mxu0 0
    %77 = vmatpush1.bf16.msra.mxu0 0
    %78 = vmatprep.subr.bf16.mxu0 0
    %79 = vmatpush1.bf16.msra.mxu0 0
    %80 = vmatprep.subr.bf16.mxu0 0
    %81 = vmatpush1.bf16.msra.mxu0 0
    %82 = vmatprep.subr.bf16.mxu0 0
    %83 = vmatpush1.bf16.msra.mxu0 0
    %84 = vmatprep.subr.bf16.mxu0 0
    %85 = vmatpush1.bf16.msra.mxu0 0
    %86 = vmatprep.subr.bf16.mxu0 0
    %87 = vmatpush1.bf16.msra.mxu0 0
    %88 = vmatprep.subr.bf16.mxu0 0
    %89 = vmatpush1.bf16.msra.mxu0 %v69
    %90 = vmatprep.subr.bf16.mxu0 0
    %91 = vmatpush1.bf16.msra.mxu0 %v68
    %92 = vmatprep.subr.bf16.mxu0 0
    %93 = vmatpush2.bf16.msra.mxu0 0
    %94 = vmatprep.subr.bf16.mxu0 0
    %95 = vmatpush2.bf16.msra.mxu0 0
    %96 = vmatprep.subr.bf16.mxu0 0
    %97 = vmatpush2.bf16.msra.mxu0 0
    %98 = vmatprep.subr.bf16.mxu0 0
    %99 = vmatpush2.bf16.msra.mxu0 0
    %100 = vmatprep.subr.bf16.mxu0 0
    %101 = vmatpush2.bf16.msra.mxu0 0
    %102 = vmatprep.subr.bf16.mxu0 0
    %103 = vmatpush2.bf16.msra.mxu0 0
    %104 = vmatprep.subr.bf16.mxu0 0
    %105 = vmatpush2.bf16.msra.mxu0 0
    %106 = vmatprep.subr.bf16.mxu0 0
    %107 = vmatpush2.bf16.msra.mxu0 0
    %108 = vmatprep.mubr.bf16.mxu0 0
    %109 = vmatmul.mubr.bf16.gmra.mxu0 %v74
    %v110 = vpop.f32.mrf.mxu0
    %v111 = vadd.f32 0.0, %v110
    %v112 = vpop.f32.mrf.mxu0
    %v113 = vpop.f32.mrf.mxu0
    %v114 = vadd.f32 0.0, %v113
    %v115 = vpop.f32.mrf.mxu0
    %116 = vdwg.mxu0
    %v117 = vadd.f32 %v47, %v111
    %v118 = vadd.f32 %v48, %v114
    %119 = vst [vmem:[#allocation2] sm:$0xff] %v117
    %120 = vst [vmem:[#allocation2 + $0x8] sm:$0xff] %v118
    // Predicated region
    $region22: #{tpu_custom_call.1} parent=1 // pred_check
      %p121 = pneg %p41
    $region23: #{tpu_custom_call.1} parent=1 // pred_check_branch
      %123 = sbr.rel (%p121) target = $region25
    $region24: #{tpu_custom_call.1} parent=1 // pred_region
      %v124 = vld [vmem:[#allocation2] sm:$0xff]
      %v125 = vld [vmem:[#allocation2 + $0x8] sm:$0xff]
      %126 = vst [vmem:[#allocation8] sm:$0xff] %v124
      %127 = vst [vmem:[#allocation8 + $0x8] sm:$0xff] %v125
    $region25: #{tpu_custom_call.1} parent=1 // pred_fallthru
      _
    // Predicated region
    $region26: #{tpu_custom_call.1} parent=1 // pred_check
      _
    $region27: #{tpu_custom_call.1} parent=1 // pred_check_branch
      %129 = sbr.rel (0) target = $region29
    $region28: #{tpu_custom_call.1} parent=1 // pred_region
      %s131 = ssub.s32 256, 256
      %132 = vsyncadd [#allocation5], %s131
      %s133 = sshll.u32 [#allocation8], 4
      %s134 = int_to_ptr.vmem [resolvable:$true] %s133
      %139 = dma.vmem_to_hbm [thread:$0]  %s134, 256, %s2, [#allocation5], 128, 128, 8
    $region29: #{tpu_custom_call.1} parent=1 // pred_fallthru
      _
    // Predicated region
    $region30: #{tpu_custom_call.1} parent=1 // pred_check
      _
    $region31: #{tpu_custom_call.1} parent=1 // pred_check_branch
      %141 = sbr.rel (0) target = $region33
    $region32: #{tpu_custom_call.1} parent=1 // pred_region
      %142 = dma.done [#allocation5], 256
    $region33: #{tpu_custom_call.1} parent=1 // pred_fallthru
      _
    %143 = vsyncpa [#allocation4], 1
    %144 = vsyncpa [#allocation7], 1
    %145 = vsyncpa [#allocation5], 1

</llo_original>
